<compile_context>
chip_gen: v6e
topology: v6e:2x2x1
jax: 0.10.0
libtpu: 0.0.40
codegen_flags: <defaults>
</compile_context>

<pallas_src>
import jax
import jax.numpy as jnp
from jax.experimental import pallas as pl
from jax.experimental.pallas import tpu as pltpu


# Items per grid step when streaming a large corpus from HBM.  >= 8192 so the
# per-step overhead (~0.35us) is amortized over ~0.5 MiB of corpus DMA.
# Lane dimension -> multiple of 128.
DEFAULT_TILE_N = 8192

# Whole-corpus-in-VMEM fast path threshold for the bf16 [DI, N_pad] slab.
# 12 MiB keeps slab + scores + headroom well under v7x's 64 MiB physical VMEM.
SINGLE_SLAB_MAX_BYTES = 12 * 1024 * 1024

# Scoped-VMEM ceiling for the streaming path: keep the double-buffered working
# set under ~48 MiB so it fits v7x (64 MiB physical); v5e/v6e have 128 MiB.
STREAM_VMEM_BUDGET = 48 * 1024 * 1024


def _round_up(x, m):
    return ((x + m - 1) // m) * m


def _vmem_spec():
    return pl.BlockSpec(memory_space=pltpu.MemorySpace.VMEM)


# --------------------------- kernel 1: user tower ---------------------------

def _user_tower_kernel(
    uid_emb_ref,    # [B, DU]   gathered user-id embeddings
    ufeat_ref,      # [B, IU]   dense user features
    w1_ref,         # [IU, 256] user_features_arch layer 0 weight (in, out)
    b1_ref,         # [1, 256]
    w2_ref,         # [256, DU] user_features_arch layer 2 weight (in, out)
    b2_ref,         # [1, DU]
    wt_id_ref,      # [DU, DI]  user_tower_arch weight rows for the id-emb half
    wt_feat_ref,    # [DU, DI]  user_tower_arch weight rows for the feat-emb half
    bt_ref,         # [1, DI]
    user_emb_ref,   # [B, DI]   output: query user embedding (bf16)
):
    # user_features_arch: Linear(IU,256) -> ReLU -> Linear(256,DU), all in f32.
    h = jnp.dot(ufeat_ref[...], w1_ref[...], preferred_element_type=jnp.float32)
    h = jnp.maximum(h + b1_ref[...], 0.0)
    feat_emb = (
        jnp.dot(h, w2_ref[...], preferred_element_type=jnp.float32) + b2_ref[...]
    )
    # user_tower_arch on cat([id_emb, feat_emb], dim=1) == sum of two matmuls.
    user_emb = (
        jnp.dot(uid_emb_ref[...], wt_id_ref[...], preferred_element_type=jnp.float32)
        + jnp.dot(feat_emb, wt_feat_ref[...], preferred_element_type=jnp.float32)
        + bt_ref[...]
    )
    # Emit bf16 once here so the scoring kernel never re-casts the resident
    # query block per grid step (and its VMEM footprint is halved).
    user_emb_ref[...] = user_emb.astype(user_emb_ref.dtype)


def user_tower_embedding(uid_emb, user_features, params):
    """Fused user tower. Returns the query embedding [B, DI] (bf16)."""
    B = uid_emb.shape[0]
    DI = params["bt"].shape[1]
    ins = (
        uid_emb, user_features,
        params["w1"], params["b1"],
        params["w2"], params["b2"],
        params["wt_id"], params["wt_feat"], params["bt"],
    )
    return pl.pallas_call(
        _user_tower_kernel,
        out_shape=jax.ShapeDtypeStruct((B, DI), jnp.bfloat16),
        in_specs=[_vmem_spec() for _ in ins],
        out_specs=_vmem_spec(),
    )(*ins)


# --------------------------- kernel 2: MIPS scoring --------------------------

def _mips_score_kernel(user_emb_ref, corpus_t_ref, scores_ref):
    # bf16 resident query [B, DI] x bf16 pre-transposed corpus tile [DI, T]:
    # lane-dense DMA, no in-kernel transpose, f32 MXU accumulation, bf16
    # lane-dense score store (halves the writeback stream vs f32).
    scores_ref[...] = jnp.dot(
        user_emb_ref[...], corpus_t_ref[...], preferred_element_type=jnp.float32
    ).astype(scores_ref.dtype)


def mips_scores(user_emb, corpus_t, *, tile_n=DEFAULT_TILE_N, force_grid=False):
    """Scores the (padded, pre-transposed) corpus. Returns [B, N_pad] bf16."""
    B, DI = user_emb.shape
    DI_c, n_pad = corpus_t.shape
    assert DI == DI_c and n_pad % 128 == 0

    corpus_bytes = DI * n_pad * corpus_t.dtype.itemsize
    cost = pl.CostEstimate(
        flops=2 * B * DI * n_pad,
        transcendentals=0,
        bytes_accessed=corpus_bytes + B * DI * 2 + B * n_pad * 2,
    )
    out_shape = jax.ShapeDtypeStruct((B, n_pad), jnp.bfloat16)

    # ---- fast path: whole corpus fits in VMEM -> single un-gridded matmul ---
    if corpus_bytes <= SINGLE_SLAB_MAX_BYTES and not force_grid:
        return pl.pallas_call(
            _mips_score_kernel,
            out_shape=out_shape,
            in_specs=[_vmem_spec(), _vmem_spec()],
            out_specs=_vmem_spec(),
            cost_estimate=cost,
            compiler_params=pltpu.CompilerParams(
                vmem_limit_bytes=32 * 1024 * 1024,
            ),
        )(user_emb, corpus_t)

    # ---- streaming path: grid over the corpus, double-buffered tiles --------
    # Pick the largest lane-multiple tile that (a) divides the padded corpus
    # and (b) keeps the double-buffered working set inside the v7x budget.
    bytes_per_item = 2 * 2 * (DI + B)   # dbl-buffered bf16 corpus col + bf16 score col
    max_tile = max(128, (STREAM_VMEM_BUDGET // bytes_per_item) // 128 * 128)
    eff_tile = max(128, min(_round_up(tile_n, 128), n_pad, max_tile))
    while n_pad % eff_tile != 0:
        eff_tile -= 128

    need = 2 * eff_tile * (DI + B) * 2 + 4 * B * DI
    vmem_limit = int(min(STREAM_VMEM_BUDGET, max(32 * 1024 * 1024, 2 * need)))

    grid = (n_pad // eff_tile,)
    return pl.pallas_call(
        _mips_score_kernel,
        out_shape=out_shape,
        grid_spec=pltpu.PrefetchScalarGridSpec(
            num_scalar_prefetch=0,
            grid=grid,
            in_specs=[
                # constant block index -> bf16 query stays resident in VMEM
                pl.BlockSpec((B, DI), lambda j: (0, 0)),
                # streamed, double-buffered pre-transposed corpus tiles
                pl.BlockSpec((DI, eff_tile), lambda j: (0, j)),
            ],
            out_specs=pl.BlockSpec((B, eff_tile), lambda j: (0, j)),
        ),
        compiler_params=pltpu.CompilerParams(
            # independent score slices -> megacore split on v7x (no-op v5e/v6e)
            dimension_semantics=("parallel",),
            vmem_limit_bytes=vmem_limit,
        ),
        cost_estimate=cost,
    )(user_emb, corpus_t)


# ------------------------------- full forward --------------------------------

def two_tower_base_retrieval_forward(user_id, user_features, user_history,
                                     params, num_items, *,
                                     tile_n=DEFAULT_TILE_N):
    """Returns top `num_items` item indices per user. Shape [B, num_items]."""
    del user_history  # unused in the base implementation (matches PyTorch module)
    # Embedding-table gather kept as JAX glue.
    uid_emb = params["user_id_emb_table"][user_id]                    # [B, DU]
    user_emb = user_tower_embedding(uid_emb, user_features, params)   # [B, DI] bf16
    scores_pad = mips_scores(user_emb, params["item_corpus_t"],
                             tile_n=tile_n)                           # [B, N_pad] bf16
    # n_corpus is a *Python int* (static); keep it static (closure / static
    # arg) if this function is ever jitted so this slice stays static.
    # Pad columns score exactly 0 and are dropped here, before top_k.
    scores = scores_pad[:, : params["n_corpus"]]
    # TODO(synk): for large batch (B >~ 64) fuse a per-tile partial top-k into
    # the scoring kernel (running [B, num_items] accumulator, pad columns
    # masked to -inf, 'parallel' split axis + inner 'arbitrary' reduction axis
    # so v7x megacore survives, per-split partials merged here).  At the
    # shapes used here (B=8, DI=32) the in-kernel k-pass argmax selection
    # (~2k lane reductions per tile) costs more cycles than the bf16 score
    # writeback it removes, so bf16 scores + lax.top_k is the faster path.
    _, top_items = jax.lax.top_k(scores, num_items)
    return top_items


# ----------------------------- parameter creation ----------------------------

def _prepare_corpus(item_corpus, tile_n=DEFAULT_TILE_N):
    """One-time transform: f32 [N, DI] -> pre-transposed, padded bf16 [DI, N_pad]."""
    n, DI = item_corpus.shape
    if DI * _round_up(n, 128) * 2 <= SINGLE_SLAB_MAX_BYTES:
        n_pad = _round_up(n, 128)                       # single-slab path
    else:
        n_pad = _round_up(n, _round_up(tile_n, 128))    # streaming path
    corpus_t = jnp.zeros((DI, n_pad), jnp.bfloat16)
    corpus_t = corpus_t.at[:, :n].set(item_corpus.T.astype(jnp.bfloat16))
    # TODO(synk): quantize the corpus to int8 (v5e/v6e MXU int path) or fp8
    # (v7x, whose MXU has no int path) with per-item scales to halve the
    # dominant corpus HBM stream again; dequant after the f32-accumulated dot.
    return corpus_t


def make_params(key, *, user_id_hash_size, user_id_embedding_dim,
                user_features_size, item_id_embedding_dim, n_corpus_items,
                tile_n=DEFAULT_TILE_N):
    DU, IU, DI = user_id_embedding_dim, user_features_size, item_id_embedding_dim
    ks = jax.random.split(key, 5)

    def lin(k, fan_in, fan_out):
        # deterministic init, stored as [in, out] (transpose of PyTorch layout)
        bound = 1.0 / jnp.sqrt(fan_in)
        kw, kb = jax.random.split(k)
        w = jax.random.uniform(kw, (fan_in, fan_out), jnp.float32, -bound, bound)
        b = jax.random.uniform(kb, (1, fan_out), jnp.float32, -bound, bound)
        return w, b

    w1, b1 = lin(ks[0], IU, 256)
    w2, b2 = lin(ks[1], 256, DU)
    wt, bt = lin(ks[2], 2 * DU, DI)

    # MIPS corpus of precomputed item embeddings (source of truth, f32 [N, DI]).
    item_corpus = jax.random.normal(ks[4], (n_corpus_items, DI), jnp.float32)
    corpus_t = _prepare_corpus(item_corpus, tile_n)

    return {
        "user_id_emb_table": jax.random.normal(
            ks[3], (user_id_hash_size, DU), jnp.float32),
        "w1": w1, "b1": b1,
        "w2": w2, "b2": b2,
        # split user_tower weight into id-emb rows and feat-emb rows
        # (matches cat([id_emb, feat_emb], dim=1)).
        "wt_id": wt[:DU, :],
        "wt_feat": wt[DU:, :],
        "bt": bt,
        "item_corpus": item_corpus,      # f32 [N, DI] (reference layout)
        "item_corpus_t": corpus_t,       # bf16 [DI, N_pad] (kernel layout)
        "n_corpus": n_corpus_items,      # static Python int
    }


# ----------------------------------- main ------------------------------------

if __name__ == "__main__":
    B = 8              # batch
    IU = 16            # user_features_size
    DU = 32            # user_id_embedding_dim
    DI = 32            # item_id_embedding_dim
    H = 4              # history length (unused in base model)
    USER_HASH = 64     # user_id_hash_size
    N_CORPUS = 1900    # MIPS corpus size (non-multiple of 128 -> tests padding)
    NUM_ITEMS = 8      # top-k items to return

    root = jax.random.PRNGKey(0)
    k_params, k_uid, k_feat, k_hist = jax.random.split(root, 4)

    params = make_params(
        k_params,
        user_id_hash_size=USER_HASH,
        user_id_embedding_dim=DU,
        user_features_size=IU,
        item_id_embedding_dim=DI,
        n_corpus_items=N_CORPUS,
    )

    user_id = jax.random.randint(k_uid, (B,), 0, USER_HASH, dtype=jnp.int32)
    user_features = jax.random.normal(k_feat, (B, IU), jnp.float32)
    user_history = jax.random.randint(k_hist, (B, H), 0, N_CORPUS, dtype=jnp.int32)

    top_items = two_tower_base_retrieval_forward(
        user_id, user_features, user_history, params, NUM_ITEMS
    )
    top_items = jax.block_until_ready(top_items)
    assert top_items.shape == (B, NUM_ITEMS)

    # --------- correctness checks against a pure-JAX reference ----------
    uid_emb = params["user_id_emb_table"][user_id]
    h_ref = jnp.maximum(user_features @ params["w1"] + params["b1"], 0.0)
    feat_emb_ref = h_ref @ params["w2"] + params["b2"]
    user_emb_ref = (uid_emb @ params["wt_id"] + feat_emb_ref @ params["wt_feat"]
                    + params["bt"])

    user_emb_k = user_tower_embedding(uid_emb, user_features, params)  # bf16
    assert jnp.allclose(user_emb_k.astype(jnp.float32), user_emb_ref,
                        rtol=2e-2, atol=2e-2)

    # Scoring reference uses the same bf16 query/corpus with f32 accumulation.
    scores_ref = jnp.dot(
        user_emb_k.astype(jnp.float32),
        params["item_corpus"].T.astype(jnp.bfloat16).astype(jnp.float32),
        preferred_element_type=jnp.float32,
    )

    # Fast path (single-slab, un-gridded): what the forward used.
    scores_slab = mips_scores(user_emb_k, params["item_corpus_t"])
    scores_slab = scores_slab[:, :N_CORPUS].astype(jnp.float32)
    assert jnp.allclose(scores_slab, scores_ref, rtol=2e-2, atol=5e-2)

    # Streaming path (forced grid, multiple tiles) must match too.
    scores_grid = mips_scores(user_emb_k, params["item_corpus_t"],
                              tile_n=512, force_grid=True)
    scores_grid = scores_grid[:, :N_CORPUS].astype(jnp.float32)
    assert jnp.allclose(scores_grid, scores_ref, rtol=2e-2, atol=5e-2)

    jax.block_until_ready((scores_slab, scores_grid))
    print("KERNEL_OK")
</pallas_src>

<mosaic_0001>
module attributes {stable_mosaic.version = 11 : i64} {
  func.func @_user_tower_kernel(%arg0: memref<8x32xf32, #tpu.memory_space<vmem>>, %arg1: memref<8x16xf32, #tpu.memory_space<vmem>>, %arg2: memref<16x256xf32, #tpu.memory_space<vmem>>, %arg3: memref<1x256xf32, #tpu.memory_space<vmem>>, %arg4: memref<256x32xf32, #tpu.memory_space<vmem>>, %arg5: memref<1x32xf32, #tpu.memory_space<vmem>>, %arg6: memref<32x32xf32, #tpu.memory_space<vmem>>, %arg7: memref<32x32xf32, #tpu.memory_space<vmem>>, %arg8: memref<1x32xf32, #tpu.memory_space<vmem>>, %arg9: memref<8x32xbf16, #tpu.memory_space<vmem>>) attributes {dimension_semantics = [], scalar_prefetch = 0 : i64, scratch_operands = 0 : i64, tpu.core_type = #tpu.core_type<tc>} {
    %c0 = arith.constant 0 : index
    %c0_0 = arith.constant 0 : index
    %0 = vector.load %arg1[%c0, %c0_0] : memref<8x16xf32, #tpu.memory_space<vmem>>, vector<8x16xf32>
    %c0_1 = arith.constant 0 : index
    %c0_2 = arith.constant 0 : index
    %1 = vector.load %arg2[%c0_1, %c0_2] : memref<16x256xf32, #tpu.memory_space<vmem>>, vector<16x256xf32>
    %cst = arith.constant dense<0.000000e+00> : vector<8x256xf32>
    %2 = tpu.matmul %0, %1, %cst {dimension_numbers = #tpu.dot_dimension_numbers<[1], [0], [0], [1], [0, 0, 1, 1], [], []>} : vector<8x16xf32>, vector<16x256xf32>, vector<8x256xf32> -> vector<8x256xf32>
    %c0_3 = arith.constant 0 : index
    %c0_4 = arith.constant 0 : index
    %3 = vector.load %arg3[%c0_3, %c0_4] : memref<1x256xf32, #tpu.memory_space<vmem>>, vector<1x256xf32>
    %4 = vector.broadcast %3 : vector<1x256xf32> to vector<8x256xf32>
    %5 = arith.addf %2, %4 : vector<8x256xf32>
    %cst_5 = arith.constant 0.000000e+00 : f32
    %6 = vector.broadcast %cst_5 : f32 to vector<8x256xf32>
    %7 = arith.maximumf %5, %6 : vector<8x256xf32>
    %c0_6 = arith.constant 0 : index
    %c0_7 = arith.constant 0 : index
    %8 = vector.load %arg4[%c0_6, %c0_7] : memref<256x32xf32, #tpu.memory_space<vmem>>, vector<256x32xf32>
    %cst_8 = arith.constant dense<0.000000e+00> : vector<8x32xf32>
    %9 = tpu.matmul %7, %8, %cst_8 {dimension_numbers = #tpu.dot_dimension_numbers<[1], [0], [0], [1], [0, 0, 1, 1], [], []>} : vector<8x256xf32>, vector<256x32xf32>, vector<8x32xf32> -> vector<8x32xf32>
    %c0_9 = arith.constant 0 : index
    %c0_10 = arith.constant 0 : index
    %10 = vector.load %arg5[%c0_9, %c0_10] : memref<1x32xf32, #tpu.memory_space<vmem>>, vector<1x32xf32>
    %11 = vector.broadcast %10 : vector<1x32xf32> to vector<8x32xf32>
    %12 = arith.addf %9, %11 : vector<8x32xf32>
    %c0_11 = arith.constant 0 : index
    %c0_12 = arith.constant 0 : index
    %13 = vector.load %arg0[%c0_11, %c0_12] : memref<8x32xf32, #tpu.memory_space<vmem>>, vector<8x32xf32>
    %c0_13 = arith.constant 0 : index
    %c0_14 = arith.constant 0 : index
    %14 = vector.load %arg6[%c0_13, %c0_14] : memref<32x32xf32, #tpu.memory_space<vmem>>, vector<32x32xf32>
    %cst_15 = arith.constant dense<0.000000e+00> : vector<8x32xf32>
    %15 = tpu.matmul %13, %14, %cst_15 {dimension_numbers = #tpu.dot_dimension_numbers<[1], [0], [0], [1], [0, 0, 1, 1], [], []>} : vector<8x32xf32>, vector<32x32xf32>, vector<8x32xf32> -> vector<8x32xf32>
    %c0_16 = arith.constant 0 : index
    %c0_17 = arith.constant 0 : index
    %16 = vector.load %arg7[%c0_16, %c0_17] : memref<32x32xf32, #tpu.memory_space<vmem>>, vector<32x32xf32>
    %cst_18 = arith.constant dense<0.000000e+00> : vector<8x32xf32>
    %17 = tpu.matmul %12, %16, %cst_18 {dimension_numbers = #tpu.dot_dimension_numbers<[1], [0], [0], [1], [0, 0, 1, 1], [], []>} : vector<8x32xf32>, vector<32x32xf32>, vector<8x32xf32> -> vector<8x32xf32>
    %18 = arith.addf %15, %17 : vector<8x32xf32>
    %c0_19 = arith.constant 0 : index
    %c0_20 = arith.constant 0 : index
    %19 = vector.load %arg8[%c0_19, %c0_20] : memref<1x32xf32, #tpu.memory_space<vmem>>, vector<1x32xf32>
    %20 = vector.broadcast %19 : vector<1x32xf32> to vector<8x32xf32>
    %21 = arith.addf %18, %20 : vector<8x32xf32>
    %22 = arith.truncf %21 : vector<8x32xf32> to vector<8x32xbf16>
    %c0_21 = arith.constant 0 : index
    %c0_22 = arith.constant 0 : index
    %23 = vector.load %arg9[%c0_21, %c0_22] : memref<8x32xbf16, #tpu.memory_space<vmem>>, vector<8x32xbf16>
    tpu.vector_store %arg9[%c0_21, %c0_22], %22 {strides = array<i32>} : memref<8x32xbf16, #tpu.memory_space<vmem>>, vector<8x32xbf16>,
    return
  }
}

</mosaic_0001>

<llo_original>
// kernel: tpu_custom_call.1
$region0: #{tpu_custom_call.1}
  #allocation0 [shape = 'u32[]', space=smem, size = 0x4, offset = 0x4, fixed_abs, tag = 'smem constant byte address 0x4 - core index']
  #allocation1 [shape = 'u32[144,128]{1,0:T(1,128)}', space=vmem, size = 0x12000, scoped, tag = 'internal scratch']
  %s0 = inlined_call_operand.vmem [shape: f32[8,32], index: 0, kind: input, shape index: {}]
  %s1 = inlined_call_operand.vmem [shape: f32[8,16], index: 1, kind: input, shape index: {}]
  %s2 = inlined_call_operand.vmem [shape: f32[16,256], index: 2, kind: input, shape index: {}]
  %s3 = inlined_call_operand.vmem [shape: f32[1,256], index: 3, kind: input, shape index: {}]
  %s4 = inlined_call_operand.vmem [shape: f32[256,32], index: 4, kind: input, shape index: {}]
  %s5 = inlined_call_operand.vmem [shape: f32[1,32], index: 5, kind: input, shape index: {}]
  %s6 = inlined_call_operand.vmem [shape: f32[32,32], index: 6, kind: input, shape index: {}]
  %s7 = inlined_call_operand.vmem [shape: f32[32,32], index: 7, kind: input, shape index: {}]
  %s8 = inlined_call_operand.vmem [shape: f32[1,32], index: 8, kind: input, shape index: {}]
  %s9 = inlined_call_operand.hbm [shape: bf16[8,32], index: 9, kind: output, shape index: {}]
  %s10 = sld [smem:[#allocation0]]
  $region46: #{tpu_custom_call.1} parent=0
    _
  %s12 = ssub.s32 1, %s10
  %s13 = scalar_select 0, %s12, %s10
  $region1: #{tpu_custom_call.1} parent=0
    #allocation2 [shape = 'u8[2048]{0}', space=vmem, size = 0x800, scoped, tag = 'output window, operand 0, single buffered']
    #allocation3 [shape = 's32[1]{0}', space=sflag, size = 0x4, scoped, tag = 'scoped memory for tpu_custom_call.1']
    %14 = vsyncpa [#allocation3], 0
    // Predicated region
    $region2: #{tpu_custom_call.1} parent=1 // pred_check
      _
    $region3: #{tpu_custom_call.1} parent=1 // pred_check_branch
      %16 = sbr.rel (0) target = $region5
    $region4: #{tpu_custom_call.1} parent=1 // pred_region
      _
    $region5: #{tpu_custom_call.1} parent=1 // pred_fallthru
      _
    // Predicated region
    $region6: #{tpu_custom_call.1} parent=1 // pred_check
      _
    $region7: #{tpu_custom_call.1} parent=1 // pred_check_branch
      %18 = sbr.rel (0) target = $region9
    $region8: #{tpu_custom_call.1} parent=1 // pred_region
      _
    $region9: #{tpu_custom_call.1} parent=1 // pred_fallthru
      _
    // Predicated region
    $region10: #{tpu_custom_call.1} parent=1 // pred_check
      _
    $region11: #{tpu_custom_call.1} parent=1 // pred_check_branch
      %20 = sbr.rel (0) target = $region13
    $region12: #{tpu_custom_call.1} parent=1 // pred_region
      _
    $region13: #{tpu_custom_call.1} parent=1 // pred_fallthru
      _
    // Predicated region
    $region14: #{tpu_custom_call.1} parent=1 // pred_check
      _
    $region15: #{tpu_custom_call.1} parent=1 // pred_check_branch
      %22 = sbr.rel (0) target = $region17
    $region16: #{tpu_custom_call.1} parent=1 // pred_region
      _
    $region17: #{tpu_custom_call.1} parent=1 // pred_fallthru
      _
    // Predicated region
    $region18: #{tpu_custom_call.1} parent=1 // pred_check
      _
    $region19: #{tpu_custom_call.1} parent=1 // pred_check_branch
      %24 = sbr.rel (0) target = $region21
    $region20: #{tpu_custom_call.1} parent=1 // pred_region
      _
    $region21: #{tpu_custom_call.1} parent=1 // pred_fallthru
      _
    // Predicated region
    $region22: #{tpu_custom_call.1} parent=1 // pred_check
      _
    $region23: #{tpu_custom_call.1} parent=1 // pred_check_branch
      %26 = sbr.rel (0) target = $region25
    $region24: #{tpu_custom_call.1} parent=1 // pred_region
      _
    $region25: #{tpu_custom_call.1} parent=1 // pred_fallthru
      _
    // Predicated region
    $region26: #{tpu_custom_call.1} parent=1 // pred_check
      _
    $region27: #{tpu_custom_call.1} parent=1 // pred_check_branch
      %28 = sbr.rel (0) target = $region29
    $region28: #{tpu_custom_call.1} parent=1 // pred_region
      _
    $region29: #{tpu_custom_call.1} parent=1 // pred_fallthru
      _
    // Predicated region
    $region30: #{tpu_custom_call.1} parent=1 // pred_check
      _
    $region31: #{tpu_custom_call.1} parent=1 // pred_check_branch
      %30 = sbr.rel (0) target = $region33
    $region32: #{tpu_custom_call.1} parent=1 // pred_region
      _
    $region33: #{tpu_custom_call.1} parent=1 // pred_fallthru
      _
    // Predicated region
    $region34: #{tpu_custom_call.1} parent=1 // pred_check
      _
    $region35: #{tpu_custom_call.1} parent=1 // pred_check_branch
      %32 = sbr.rel (0) target = $region37
    $region36: #{tpu_custom_call.1} parent=1 // pred_region
      _
    $region37: #{tpu_custom_call.1} parent=1 // pred_fallthru
      _
    %v33 = vld [vmem:[%s1] sm:$0xff]
    %v34 = vld [vmem:[%s2] sm:$0xff]
    %v35 = vld [vmem:[%s2 + $0x8] sm:$0xff]
    %v36 = vld [vmem:[%s2 + $0x10] sm:$0xff]
    %v37 = vld [vmem:[%s2 + $0x18] sm:$0xff]
    %v38 = vld [vmem:[%s3] sm:$0x3]
    %v40 = vlaneseq
    %v41 = vshrl.u32 %v40, 7
    %v42 = vsub.s32 0, %v41
    %v43 = vrot.slane %v38, %v42
    %v44 = vlaneseq
    %v45 = vshrl.u32 %v44, 7
    %v46 = vsub.s32 1, %v45
    %v47 = vrot.slane %v38, %v46
    %vm50 = vcmask 130048
    %v52 = vsel %vm50, %v33, 0
    %54 = vmatprep.subr.mxu0 0.0
    %55 = vmatpush1.msra.mxu0 0.0
    %56 = vmatprep.subr.mxu0 0.0
    %57 = vmatpush1.msra.mxu0 0.0
    %58 = vmatprep.subr.mxu0 0.0
    %59 = vmatpush1.msra.mxu0 0.0
    %60 = vmatprep.subr.mxu0 0.0
    %61 = vmatpush1.msra.mxu0 0.0
    %62 = vmatprep.subr.mxu0 0.0
    %63 = vmatpush1.msra.mxu0 0.0
    %64 = vmatprep.subr.mxu0 0.0
    %65 = vmatpush1.msra.mxu0 0.0
    %66 = vmatprep.subr.mxu0 0.0
    %67 = vmatpush1.msra.mxu0 0.0
    %68 = vmatprep.subr.mxu0 0.0
    %69 = vmatpush1.msra.mxu0 0.0
    %70 = vmatprep.subr.mxu0 0.0
    %71 = vmatpush1.msra.mxu0 0.0
    %72 = vmatprep.subr.mxu0 0.0
    %73 = vmatpush1.msra.mxu0 0.0
    %74 = vmatprep.subr.mxu0 0.0
    %75 = vmatpush1.msra.mxu0 0.0
    %76 = vmatprep.subr.mxu0 0.0
    %77 = vmatpush1.msra.mxu0 0.0
    %78 = vmatprep.subr.mxu0 0.0
    %79 = vmatpush1.msra.mxu0 0.0
    %80 = vmatprep.subr.mxu0 0.0
    %81 = vmatpush1.msra.mxu0 0.0
    %82 = vmatprep.subr.mxu0 %v37
    %83 = vmatpush1.msra.mxu0 %v36
    %84 = vmatprep.subr.mxu0 %v35
    %85 = vmatpush1.msra.mxu0 %v34
    %86 = vmatprep.subr.mxu0 0.0
    %87 = vmatpush2.msra.mxu0 0.0
    %88 = vmatprep.subr.mxu0 0.0
    %89 = vmatpush2.msra.mxu0 0.0
    %90 = vmatprep.subr.mxu0 0.0
    %91 = vmatpush2.msra.mxu0 0.0
    %92 = vmatprep.subr.mxu0 0.0
    %93 = vmatpush2.msra.mxu0 0.0
    %94 = vmatprep.subr.mxu0 0.0
    %95 = vmatpush2.msra.mxu0 0.0
    %96 = vmatprep.subr.mxu0 0.0
    %97 = vmatpush2.msra.mxu0 0.0
    %98 = vmatprep.subr.mxu0 0.0
    %99 = vmatpush2.msra.mxu0 0.0
    %100 = vmatprep.subr.mxu0 0.0
    %101 = vmatpush2.msra.mxu0 0.0
    %102 = vmatprep.subr.mxu0 0.0
    %103 = vmatpush2.msra.mxu0 0.0
    %104 = vmatprep.subr.mxu0 0.0
    %105 = vmatpush2.msra.mxu0 0.0
    %106 = vmatprep.subr.mxu0 0.0
    %107 = vmatpush2.msra.mxu0 0.0
    %108 = vmatprep.subr.mxu0 0.0
    %109 = vmatpush2.msra.mxu0 0.0
    %110 = vmatprep.subr.mxu0 0.0
    %111 = vmatpush2.msra.mxu0 0.0
    %112 = vmatprep.subr.mxu0 0.0
    %113 = vmatpush2.msra.mxu0 0.0
    %114 = vmatprep.subr.mxu0 0.0
    %115 = vmatpush2.msra.mxu0 0.0
    %116 = vmatprep.subr.mxu0 0.0
    %117 = vmatpush2.msra.mxu0 0.0
    %118 = vmatprep.mubr.f32.mxu0 0.0
    %119 = vmatmul.mubr.f32.gmra.mxu0 %v52
    %v120 = vpop.f32.mrf.mxu0
    %v121 = vadd.f32 %v43, %v120
    %v122 = vpop.f32.mrf.mxu0
    %v123 = vadd.f32 %v47, %v122
    %124 = vdwg.mxu0
    %v125 = vmax.f32 %v121, 0.0
    %v126 = vmax.f32 %v123, 0.0
    %v127 = vld [vmem:[%s4] sm:$0xff]
    %v128 = vld [vmem:[%s4 + $0x8] sm:$0xff]
    %v129 = vld [vmem:[%s4 + $0x10] sm:$0xff]
    %v130 = vld [vmem:[%s4 + $0x18] sm:$0xff]
    %v131 = vld [vmem:[%s4 + $0x20] sm:$0xff]
    %v132 = vld [vmem:[%s4 + $0x28] sm:$0xff]
    %v133 = vld [vmem:[%s4 + $0x30] sm:$0xff]
    %v134 = vld [vmem:[%s4 + $0x38] sm:$0xff]
    %v135 = vld [vmem:[%s4 + $0x40] sm:$0xff]
    %v136 = vld [vmem:[%s4 + $0x48] sm:$0xff]
    %v137 = vld [vmem:[%s4 + $0x50] sm:$0xff]
    %v138 = vld [vmem:[%s4 + $0x58] sm:$0xff]
    %v139 = vld [vmem:[%s4 + $0x60] sm:$0xff]
    %v140 = vld [vmem:[%s4 + $0x68] sm:$0xff]
    %v141 = vld [vmem:[%s4 + $0x70] sm:$0xff]
    %v142 = vld [vmem:[%s4 + $0x78] sm:$0xff]
    %v143 = vld [vmem:[%s4 + $0x80] sm:$0xff]
    %v144 = vld [vmem:[%s4 + $0x88] sm:$0xff]
    %v145 = vld [vmem:[%s4 + $0x90] sm:$0xff]
    %v146 = vld [vmem:[%s4 + $0x98] sm:$0xff]
    %v147 = vld [vmem:[%s4 + $0xa0] sm:$0xff]
    %v148 = vld [vmem:[%s4 + $0xa8] sm:$0xff]
    %v149 = vld [vmem:[%s4 + $0xb0] sm:$0xff]
    %v150 = vld [vmem:[%s4 + $0xb8] sm:$0xff]
    %v151 = vld [vmem:[%s4 + $0xc0] sm:$0xff]
    %v152 = vld [vmem:[%s4 + $0xc8] sm:$0xff]
    %v153 = vld [vmem:[%s4 + $0xd0] sm:$0xff]
    %v154 = vld [vmem:[%s4 + $0xd8] sm:$0xff]
    %v155 = vld [vmem:[%s4 + $0xe0] sm:$0xff]
    %v156 = vld [vmem:[%s4 + $0xe8] sm:$0xff]
    %v157 = vld [vmem:[%s4 + $0xf0] sm:$0xff]
    %v158 = vld [vmem:[%s4 + $0xf8] sm:$0xff]
    %v159 = vld [vmem:[%s5] sm:$0x1]
    %v161 = vlaneseq
    %v162 = vshrl.u32 %v161, 7
    %v163 = vsub.s32 0, %v162
    %v164 = vrot.slane %v159, %v163
    %166 = vmatprep.subr.mxu0 0.0
    %167 = vmatpush1.msra.mxu0 %v142
    %168 = vmatprep.subr.mxu0 0.0
    %169 = vmatpush1.msra.mxu0 %v141
    %170 = vmatprep.subr.mxu0 0.0
    %171 = vmatpush1.msra.mxu0 %v140
    %172 = vmatprep.subr.mxu0 0.0
    %173 = vmatpush1.msra.mxu0 %v139
    %174 = vmatprep.subr.mxu0 0.0
    %175 = vmatpush1.msra.mxu0 %v138
    %176 = vmatprep.subr.mxu0 0.0
    %177 = vmatpush1.msra.mxu0 %v137
    %178 = vmatprep.subr.mxu0 0.0
    %179 = vmatpush1.msra.mxu0 %v136
    %180 = vmatprep.subr.mxu0 0.0
    %181 = vmatpush1.msra.mxu0 %v135
    %182 = vmatprep.subr.mxu0 0.0
    %183 = vmatpush1.msra.mxu0 %v134
    %184 = vmatprep.subr.mxu0 0.0
    %185 = vmatpush1.msra.mxu0 %v133
    %186 = vmatprep.subr.mxu0 0.0
    %187 = vmatpush1.msra.mxu0 %v132
    %188 = vmatprep.subr.mxu0 0.0
    %189 = vmatpush1.msra.mxu0 %v131
    %190 = vmatprep.subr.mxu0 0.0
    %191 = vmatpush1.msra.mxu0 %v130
    %192 = vmatprep.subr.mxu0 0.0
    %193 = vmatpush1.msra.mxu0 %v129
    %194 = vmatprep.subr.mxu0 0.0
    %195 = vmatpush1.msra.mxu0 %v128
    %196 = vmatprep.subr.mxu0 0.0
    %197 = vmatpush1.msra.mxu0 %v127
    %198 = vmatprep.subr.mxu0 0.0
    %199 = vmatpush2.msra.mxu0 %v158
    %200 = vmatprep.subr.mxu0 0.0
    %201 = vmatpush2.msra.mxu0 %v157
    %202 = vmatprep.subr.mxu0 0.0
    %203 = vmatpush2.msra.mxu0 %v156
    %204 = vmatprep.subr.mxu0 0.0
    %205 = vmatpush2.msra.mxu0 %v155
    %206 = vmatprep.subr.mxu0 0.0
    %207 = vmatpush2.msra.mxu0 %v154
    %208 = vmatprep.subr.mxu0 0.0
    %209 = vmatpush2.msra.mxu0 %v153
    %210 = vmatprep.subr.mxu0 0.0
    %211 = vmatpush2.msra.mxu0 %v152
    %212 = vmatprep.subr.mxu0 0.0
    %213 = vmatpush2.msra.mxu0 %v151
    %214 = vmatprep.subr.mxu0 0.0
    %215 = vmatpush2.msra.mxu0 %v150
    %216 = vmatprep.subr.mxu0 0.0
    %217 = vmatpush2.msra.mxu0 %v149
    %218 = vmatprep.subr.mxu0 0.0
    %219 = vmatpush2.msra.mxu0 %v148
    %220 = vmatprep.subr.mxu0 0.0
    %221 = vmatpush2.msra.mxu0 %v147
    %222 = vmatprep.subr.mxu0 0.0
    %223 = vmatpush2.msra.mxu0 %v146
    %224 = vmatprep.subr.mxu0 0.0
    %225 = vmatpush2.msra.mxu0 %v145
    %226 = vmatprep.subr.mxu0 0.0
    %227 = vmatpush2.msra.mxu0 %v144
    %228 = vmatprep.subr.mxu0 0.0
    %229 = vmatpush2.msra.mxu0 %v143
    %230 = vmatprep.mubr.f32.mxu0 %v126
    %231 = vmatmul.mubr.f32.gmra.mxu0 %v125
    %v232 = vpop.f32.mrf.mxu0
    %v233 = vadd.f32 %v164, %v232
    %v234 = vpop.f32.mrf.mxu0
    %235 = vdwg.mxu0
    %v236 = vld [vmem:[%s0] sm:$0xff]
    %v237 = vld [vmem:[%s6] sm:$0xff]
    %v238 = vld [vmem:[%s6 + $0x8] sm:$0xff]
    %v239 = vld [vmem:[%s6 + $0x10] sm:$0xff]
    %v240 = vld [vmem:[%s6 + $0x18] sm:$0xff]
    %v241 = vld [vmem:[%s7] sm:$0xff]
    %v242 = vld [vmem:[%s7 + $0x8] sm:$0xff]
    %v243 = vld [vmem:[%s7 + $0x10] sm:$0xff]
    %v244 = vld [vmem:[%s7 + $0x18] sm:$0xff]
    %vm245 = vcmask 261120
    %v247 = vsel %vm245, %v233, 0
    %249 = vmatprep.subr.mxu0 0.0
    %250 = vmatpush1.msra.mxu0 0.0
    %251 = vmatprep.subr.mxu0 0.0
    %252 = vmatpush1.msra.mxu0 0.0
    %253 = vmatprep.subr.mxu0 0.0
    %254 = vmatpush1.msra.mxu0 0.0
    %255 = vmatprep.subr.mxu0 0.0
    %256 = vmatpush1.msra.mxu0 0.0
    %257 = vmatprep.subr.mxu0 0.0
    %258 = vmatpush1.msra.mxu0 0.0
    %259 = vmatprep.subr.mxu0 0.0
    %260 = vmatpush1.msra.mxu0 0.0
    %261 = vmatprep.subr.mxu0 0.0
    %262 = vmatpush1.msra.mxu0 0.0
    %263 = vmatprep.subr.mxu0 0.0
    %264 = vmatpush1.msra.mxu0 0.0
    %265 = vmatprep.subr.mxu0 0.0
    %266 = vmatpush1.msra.mxu0 0.0
    %267 = vmatprep.subr.mxu0 0.0
    %268 = vmatpush1.msra.mxu0 0.0
    %269 = vmatprep.subr.mxu0 0.0
    %270 = vmatpush1.msra.mxu0 0.0
    %271 = vmatprep.subr.mxu0 0.0
    %272 = vmatpush1.msra.mxu0 0.0
    %273 = vmatprep.subr.mxu0 0.0
    %274 = vmatpush1.msra.mxu0 %v244
    %275 = vmatprep.subr.mxu0 0.0
    %276 = vmatpush1.msra.mxu0 %v243
    %277 = vmatprep.subr.mxu0 0.0
    %278 = vmatpush1.msra.mxu0 %v242
    %279 = vmatprep.subr.mxu0 0.0
    %280 = vmatpush1.msra.mxu0 %v241
    %281 = vmatprep.subr.mxu0 0.0
    %282 = vmatpush2.msra.mxu0 0.0
    %283 = vmatprep.subr.mxu0 0.0
    %284 = vmatpush2.msra.mxu0 0.0
    %285 = vmatprep.subr.mxu0 0.0
    %286 = vmatpush2.msra.mxu0 0.0
    %287 = vmatprep.subr.mxu0 0.0
    %288 = vmatpush2.msra.mxu0 0.0
    %289 = vmatprep.subr.mxu0 0.0
    %290 = vmatpush2.msra.mxu0 0.0
    %291 = vmatprep.subr.mxu0 0.0
    %292 = vmatpush2.msra.mxu0 0.0
    %293 = vmatprep.subr.mxu0 0.0
    %294 = vmatpush2.msra.mxu0 0.0
    %295 = vmatprep.subr.mxu0 0.0
    %296 = vmatpush2.msra.mxu0 0.0
    %297 = vmatprep.subr.mxu0 0.0
    %298 = vmatpush2.msra.mxu0 0.0
    %299 = vmatprep.subr.mxu0 0.0
    %300 = vmatpush2.msra.mxu0 0.0
    %301 = vmatprep.subr.mxu0 0.0
    %302 = vmatpush2.msra.mxu0 0.0
    %303 = vmatprep.subr.mxu0 0.0
    %304 = vmatpush2.msra.mxu0 0.0
    %305 = vmatprep.subr.mxu0 0.0
    %306 = vmatpush2.msra.mxu0 0.0
    %307 = vmatprep.subr.mxu0 0.0
    %308 = vmatpush2.msra.mxu0 0.0
    %309 = vmatprep.subr.mxu0 0.0
    %310 = vmatpush2.msra.mxu0 0.0
    %311 = vmatprep.subr.mxu0 0.0
    %312 = vmatpush2.msra.mxu0 0.0
    %313 = vmatprep.mubr.f32.mxu0 0.0
    %314 = vmatmul.mubr.f32.gmra.mxu0 %v247
    %v315 = vpop.f32.mrf.mxu0
    %v316 = vadd.f32 0.0, %v315
    %v317 = vpop.f32.mrf.mxu0
    %318 = vdwg.mxu0
    %v320 = vsel %vm245, %v236, 0
    %322 = vmatprep.subr.mxu0 0.0
    %323 = vmatpush1.msra.mxu0 0.0
    %324 = vmatprep.subr.mxu0 0.0
    %325 = vmatpush1.msra.mxu0 0.0
    %326 = vmatprep.subr.mxu0 0.0
    %327 = vmatpush1.msra.mxu0 0.0
    %328 = vmatprep.subr.mxu0 0.0
    %329 = vmatpush1.msra.mxu0 0.0
    %330 = vmatprep.subr.mxu0 0.0
    %331 = vmatpush1.msra.mxu0 0.0
    %332 = vmatprep.subr.mxu0 0.0
    %333 = vmatpush1.msra.mxu0 0.0
    %334 = vmatprep.subr.mxu0 0.0
    %335 = vmatpush1.msra.mxu0 0.0
    %336 = vmatprep.subr.mxu0 0.0
    %337 = vmatpush1.msra.mxu0 0.0
    %338 = vmatprep.subr.mxu0 0.0
    %339 = vmatpush1.msra.mxu0 0.0
    %340 = vmatprep.subr.mxu0 0.0
    %341 = vmatpush1.msra.mxu0 0.0
    %342 = vmatprep.subr.mxu0 0.0
    %343 = vmatpush1.msra.mxu0 0.0
    %344 = vmatprep.subr.mxu0 0.0
    %345 = vmatpush1.msra.mxu0 0.0
    %346 = vmatprep.subr.mxu0 0.0
    %347 = vmatpush1.msra.mxu0 %v240
    %348 = vmatprep.subr.mxu0 0.0
    %349 = vmatpush1.msra.mxu0 %v239
    %350 = vmatprep.subr.mxu0 0.0
    %351 = vmatpush1.msra.mxu0 %v238
    %352 = vmatprep.subr.mxu0 0.0
    %353 = vmatpush1.msra.mxu0 %v237
    %354 = vmatprep.subr.mxu0 0.0
    %355 = vmatpush2.msra.mxu0 0.0
    %356 = vmatprep.subr.mxu0 0.0
    %357 = vmatpush2.msra.mxu0 0.0
    %358 = vmatprep.subr.mxu0 0.0
    %359 = vmatpush2.msra.mxu0 0.0
    %360 = vmatprep.subr.mxu0 0.0
    %361 = vmatpush2.msra.mxu0 0.0
    %362 = vmatprep.subr.mxu0 0.0
    %363 = vmatpush2.msra.mxu0 0.0
    %364 = vmatprep.subr.mxu0 0.0
    %365 = vmatpush2.msra.mxu0 0.0
    %366 = vmatprep.subr.mxu0 0.0
    %367 = vmatpush2.msra.mxu0 0.0
    %368 = vmatprep.subr.mxu0 0.0
    %369 = vmatpush2.msra.mxu0 0.0
    %370 = vmatprep.subr.mxu0 0.0
    %371 = vmatpush2.msra.mxu0 0.0
    %372 = vmatprep.subr.mxu0 0.0
    %373 = vmatpush2.msra.mxu0 0.0
    %374 = vmatprep.subr.mxu0 0.0
    %375 = vmatpush2.msra.mxu0 0.0
    %376 = vmatprep.subr.mxu0 0.0
    %377 = vmatpush2.msra.mxu0 0.0
    %378 = vmatprep.subr.mxu0 0.0
    %379 = vmatpush2.msra.mxu0 0.0
    %380 = vmatprep.subr.mxu0 0.0
    %381 = vmatpush2.msra.mxu0 0.0
    %382 = vmatprep.subr.mxu0 0.0
    %383 = vmatpush2.msra.mxu0 0.0
    %384 = vmatprep.subr.mxu0 0.0
    %385 = vmatpush2.msra.mxu0 0.0
    %386 = vmatprep.mubr.f32.mxu0 0.0
    %387 = vmatmul.mubr.f32.gmra.mxu0 %v320
    %v388 = vpop.f32.mrf.mxu0
    %v389 = vadd.f32 %v316, %v388
    %v390 = vpop.f32.mrf.mxu0
    %391 = vdwg.mxu0
    %v392 = vld [vmem:[%s8] sm:$0x1]
    %v394 = vlaneseq
    %v395 = vshrl.u32 %v394, 7
    %v396 = vsub.s32 0, %v395
    %v397 = vrot.slane %v392, %v396
    %v399 = vadd.f32 %v389, %v397
    %v400 = vpack.c.bf16 %v399, %v399
    %vm401 = vcmask 257024
    %402 = vst.msk [vmem:[#allocation2] sm:$0xf] %vm401, %v400
    // Predicated region
    $region38: #{tpu_custom_call.1} parent=1 // pred_check
      _
    $region39: #{tpu_custom_call.1} parent=1 // pred_check_branch
      %404 = sbr.rel (0) target = $region41
    $region40: #{tpu_custom_call.1} parent=1 // pred_region
      %s406 = ssub.s32 64, 64
      %407 = vsyncadd [#allocation3], %s406
      %s409 = sshll.u32 [#allocation2], 4
      %s410 = int_to_ptr.vmem [resolvable:$true] %s409
      %412 = dma.vmem_to_hbm [thread:$0]  %s410, 64, %s9, [#allocation3]
    $region41: #{tpu_custom_call.1} parent=1 // pred_fallthru
      _
    // Predicated region
    $region42: #{tpu_custom_call.1} parent=1 // pred_check
      _
    $region43: #{tpu_custom_call.1} parent=1 // pred_check_branch
      %414 = sbr.rel (0) target = $region45
    $region44: #{tpu_custom_call.1} parent=1 // pred_region
      %415 = dma.done [#allocation3], 64
    $region45: #{tpu_custom_call.1} parent=1 // pred_fallthru
      _
    %416 = vsyncpa [#allocation3], 1

</llo_original>
